<compile_context>
chip_gen: v7x
topology: tpu7x:2x2x1
jax: 0.10.0
libtpu: 0.0.40
codegen_flags: <defaults>
</compile_context>

<pallas_src>
import jax
import jax.numpy as jnp
import numpy as np
from jax import lax
from jax.experimental import pallas as pl
from jax.experimental.pallas import tpu as pltpu

_FEAT = 8          # xyz padded to 8 features (sublane-friendly, tiny DMA)
_PAD_X = 1.0e6     # padded sampled points live here ...
_PAD_Y = -1.0e6    # ... padded raw points here, so padded<->padded dist != 0


def _round_up(v, m):
    return (v + m - 1) // m * m


def _make_kernel(pairs_per_block):
    def kernel(counts_ref, x_ref, yt_ref, out_ref):
        """counts_ref: SMEM (2*P_padded,) int32  [n0, m0, n1, m1, ...]
           x_ref:      VMEM (B_p, N_max, 8)   sampled xyz (pads at +1e6)
           yt_ref:     VMEM (B_p, 8, M_max)   raw xyz transposed (pads at -1e6)
           out_ref:    VMEM (1, B_p, 128)     per-pair loss, lane-dense
        """
        p_block = pl.program_id(0)
        rows = []
        for pp in range(pairs_per_block):        # small, unrolled
            gidx = p_block * pairs_per_block + pp
            n_true = counts_ref[2 * gidx]
            m_true = counts_ref[2 * gidx + 1]

            x = x_ref[pp]                         # (N_max, 8)
            yt = yt_ref[pp]                       # (8, M_max)

            # Squared distances via ||x||^2 + ||y||^2 + (-2x).y  (MXU, K=8).
            xx = jnp.sum(x * x, axis=-1, keepdims=True)        # (N_max, 1)
            yy = jnp.sum(yt * yt, axis=0, keepdims=True)       # (1, M_max)
            xy = jnp.dot(x * (-2.0), yt,
                         preferred_element_type=jnp.float32)   # (N_max, M_max)
            d2 = xx + yy + xy                                   # no full-matrix clamp/mask

            # Padded rows/cols hold huge coordinates -> they never win a min.
            row_min = jnp.min(d2, axis=1, keepdims=True)        # (N_max, 1)
            col_min = jnp.min(d2, axis=0, keepdims=True)        # (1, M_max)

            # Clamp + sqrt only on the N+M mins (sqrt is monotone).
            row_d = jnp.sqrt(jnp.maximum(row_min, 0.0))
            col_d = jnp.sqrt(jnp.maximum(col_min, 0.0))

            n_max = x.shape[0]
            m_max = yt.shape[1]
            row_valid = lax.broadcasted_iota(jnp.int32, (n_max, 1), 0) < n_true
            col_valid = lax.broadcasted_iota(jnp.int32, (1, m_max), 1) < m_true

            row_masked = jnp.where(row_valid, row_d, 0.0)        # (N_max, 1)
            col_masked = jnp.where(col_valid, col_d, 0.0)        # (1, M_max)

            inv_n = 1.0 / n_true.astype(jnp.float32)
            inv_m = 1.0 / m_true.astype(jnp.float32)

            lf = jnp.sum(row_masked) * inv_n
            lm = jnp.max(row_masked)          # row_d >= 0, so 0-fill is safe for max
            lb = jnp.sum(col_masked) * inv_m

            loss = 5.0 * lb + lf + lm
            rows.append(jnp.full((1, 128), loss, dtype=jnp.float32))

        out_ref[...] = jnp.concatenate(rows, axis=0)[None]
    return kernel


def sample_loss(sampled_lidar_list, raw_lidar_list, pairs_per_block=None):
    """JAX/Pallas equivalent of SampleLoss.forward (lists of [Ni, >=3] arrays)."""
    assert len(sampled_lidar_list) == len(raw_lidar_list)
    num_pairs = len(sampled_lidar_list)
    assert num_pairs > 0

    ns = [int(s.shape[0]) for s in sampled_lidar_list]
    ms = [int(r.shape[0]) for r in raw_lidar_list]
    assert min(ns) > 0 and min(ms) > 0, "empty point cloud"
    n_max = _round_up(max(ns), 8)
    m_max = _round_up(max(ms), 128)

    if pairs_per_block is None:
        pairs_per_block = min(num_pairs, 4)
    p_padded = _round_up(num_pairs, pairs_per_block)
    n_blocks = p_padded // pairs_per_block

    x_rows, y_rows, cnts = [], [], []
    for s, r, n, m in zip(sampled_lidar_list, raw_lidar_list, ns, ms):
        sx = jnp.asarray(s[:, :3], jnp.float32)
        rx = jnp.asarray(r[:, :3], jnp.float32)
        # Translation-invariant: subtract per-pair centroid to avoid catastrophic
        # cancellation in the ||x||^2+||y||^2-2xy expansion at large coordinates.
        centroid = jnp.mean(rx, axis=0, keepdims=True)
        sx = sx - centroid
        rx = rx - centroid

        xp = jnp.zeros((n_max, _FEAT), jnp.float32)
        xp = xp.at[:n, :3].set(sx)
        xp = xp.at[n:, :3].set(_PAD_X)            # padded sampled points far away

        yp = jnp.zeros((m_max, _FEAT), jnp.float32)
        yp = yp.at[:m, :3].set(rx)
        yp = yp.at[m:, :3].set(_PAD_Y)            # padded raw points far away

        x_rows.append(xp)
        y_rows.append(yp.T)                        # (8, M_max)
        cnts.extend([n, m])

    # Pad the pair axis by replicating the last pair; those results are sliced off.
    for _ in range(p_padded - num_pairs):
        x_rows.append(x_rows[-1])
        y_rows.append(y_rows[-1])
        cnts.extend(cnts[-2:])

    x_all = jnp.stack(x_rows)                      # (P_padded, N_max, 8)
    yt_all = jnp.stack(y_rows)                     # (P_padded, 8, M_max)
    counts = jnp.asarray(np.asarray(cnts, np.int32))   # (2*P_padded,) flat SMEM

    kernel = _make_kernel(pairs_per_block)
    per_block = pl.pallas_call(
        kernel,
        out_shape=jax.ShapeDtypeStruct((n_blocks, pairs_per_block, 128), jnp.float32),
        grid_spec=pltpu.PrefetchScalarGridSpec(
            num_scalar_prefetch=1,
            grid=(n_blocks,),
            in_specs=[
                pl.BlockSpec((pairs_per_block, n_max, _FEAT),
                             lambda p, counts: (p, 0, 0)),
                pl.BlockSpec((pairs_per_block, _FEAT, m_max),
                             lambda p, counts: (p, 0, 0)),
            ],
            out_specs=pl.BlockSpec((1, pairs_per_block, 128),
                                   lambda p, counts: (p, 0, 0)),
        ),
        compiler_params=pltpu.CompilerParams(
            dimension_semantics=("parallel",)),
    )(counts, x_all, yt_all)

    losses = per_block[:, :, 0].reshape(-1)[:num_pairs]
    return jnp.mean(losses)


def _reference_loss(sampled_lidar_list, raw_lidar_list):
    """NumPy f64 reference mirroring the PyTorch forward."""
    total = 0.0
    for s, r in zip(sampled_lidar_list, raw_lidar_list):
        sx = np.asarray(s)[:, :3].astype(np.float64)
        rx = np.asarray(r)[:, :3].astype(np.float64)
        d = np.sqrt(
            np.maximum(
                (sx * sx).sum(-1)[:, None]
                + (rx * rx).sum(-1)[None, :]
                - 2.0 * sx @ rx.T,
                0.0,
            )
        )
        LB = d.min(axis=0).mean()
        LF = d.min(axis=1).mean()
        LM = d.min(axis=1).max()
        total += 5 * LB + LF + LM
    return total / len(sampled_lidar_list)


if __name__ == "__main__":
    key = jax.random.PRNGKey(0)
    k0, k1, k2, k3 = jax.random.split(key, 4)

    # Two pairs of point clouds, (x, y, z, intensity) columns like real lidar.
    sampled_lidar_list = [
        jax.random.uniform(k0, (64, 4), jnp.float32, minval=-10.0, maxval=10.0),
        jax.random.uniform(k1, (96, 4), jnp.float32, minval=-10.0, maxval=10.0),
    ]
    raw_lidar_list = [
        jax.random.uniform(k2, (160, 4), jnp.float32, minval=-10.0, maxval=10.0),
        jax.random.uniform(k3, (128, 4), jnp.float32, minval=-10.0, maxval=10.0),
    ]

    loss = sample_loss(sampled_lidar_list, raw_lidar_list)
    loss = jax.block_until_ready(loss)

    ref = _reference_loss(sampled_lidar_list, raw_lidar_list)
    np.testing.assert_allclose(np.asarray(loss), ref, rtol=1e-4, atol=1e-4)

    print("KERNEL_OK")
</pallas_src>

<mosaic_0001>
module attributes {stable_mosaic.version = 11 : i64} {
  func.func @kernel(%arg0: i32, %arg1: memref<4xi32, #tpu.memory_space<smem>>, %arg2: memref<2x96x8xf32, #tpu.memory_space<vmem>>, %arg3: memref<2x8x256xf32, #tpu.memory_space<vmem>>, %arg4: memref<1x2x128xf32, #tpu.memory_space<vmem>>) attributes {dimension_semantics = [#tpu.dimension_semantics<parallel>], iteration_bounds = array<i64: 1>, scalar_prefetch = 1 : i64, scratch_operands = 0 : i64, tpu.core_type = #tpu.core_type<tc>, window_params = [{transform_indices = @transform_0, window_bounds = array<i64: 2, 96, 8>}, {transform_indices = @transform_1, window_bounds = array<i64: 2, 8, 256>}, {transform_indices = @transform_2, window_bounds = array<i64: 1, 2, 128>}]} {
    %c2_i32 = arith.constant 2 : i32
    %0 = arith.muli %arg0, %c2_i32 : i32
    %c0_i32 = arith.constant 0 : i32
    %1 = arith.addi %0, %c0_i32 : i32
    %c2_i32_0 = arith.constant 2 : i32
    %2 = arith.muli %c2_i32_0, %1 : i32
    %3 = arith.index_cast %2 : i32 to index
    %4 = memref.load %arg1[%3] : memref<4xi32, #tpu.memory_space<smem>>
    %c2_i32_1 = arith.constant 2 : i32
    %5 = arith.muli %c2_i32_1, %1 : i32
    %c1_i32 = arith.constant 1 : i32
    %6 = arith.addi %5, %c1_i32 : i32
    %7 = arith.index_cast %6 : i32 to index
    %8 = memref.load %arg1[%7] : memref<4xi32, #tpu.memory_space<smem>>
    %c0 = arith.constant 0 : index
    %c0_2 = arith.constant 0 : index
    %c0_3 = arith.constant 0 : index
    %9 = vector.load %arg2[%c0, %c0_2, %c0_3] : memref<2x96x8xf32, #tpu.memory_space<vmem>>, vector<1x96x8xf32>
    %10 = vector.shape_cast %9 : vector<1x96x8xf32> to vector<96x8xf32>
    %c0_4 = arith.constant 0 : index
    %c0_5 = arith.constant 0 : index
    %c0_6 = arith.constant 0 : index
    %11 = vector.load %arg3[%c0_4, %c0_5, %c0_6] : memref<2x8x256xf32, #tpu.memory_space<vmem>>, vector<1x8x256xf32>
    %12 = vector.shape_cast %11 : vector<1x8x256xf32> to vector<8x256xf32>
    %13 = arith.mulf %10, %10 : vector<96x8xf32>
    %cst = arith.constant dense<0.000000e+00> : vector<96xf32>
    %14 = vector.multi_reduction <add>, %13, %cst [1] : vector<96x8xf32> to vector<96xf32>
    %15 = vector.shape_cast %14 : vector<96xf32> to vector<96x1xf32>
    %16 = arith.mulf %12, %12 : vector<8x256xf32>
    %cst_7 = arith.constant dense<0.000000e+00> : vector<256xf32>
    %17 = vector.multi_reduction <add>, %16, %cst_7 [0] : vector<8x256xf32> to vector<256xf32>
    %18 = vector.shape_cast %17 : vector<256xf32> to vector<1x256xf32>
    %cst_8 = arith.constant -2.000000e+00 : f32
    %19 = vector.broadcast %cst_8 : f32 to vector<96x8xf32>
    %20 = arith.mulf %10, %19 : vector<96x8xf32>
    %cst_9 = arith.constant dense<0.000000e+00> : vector<96x256xf32>
    %21 = tpu.matmul %20, %12, %cst_9 {dimension_numbers = #tpu.dot_dimension_numbers<[1], [0], [0], [1], [0, 0, 1, 1], [], []>} : vector<96x8xf32>, vector<8x256xf32>, vector<96x256xf32> -> vector<96x256xf32>
    %22 = vector.broadcast %15 : vector<96x1xf32> to vector<96x256xf32>
    %23 = vector.broadcast %18 : vector<1x256xf32> to vector<96x256xf32>
    %24 = arith.addf %22, %23 : vector<96x256xf32>
    %25 = arith.addf %24, %21 : vector<96x256xf32>
    %cst_10 = arith.constant dense<0x7F800000> : vector<96xf32>
    %26 = vector.multi_reduction <minimumf>, %25, %cst_10 [1] : vector<96x256xf32> to vector<96xf32>
    %27 = vector.shape_cast %26 : vector<96xf32> to vector<96x1xf32>
    %cst_11 = arith.constant dense<0x7F800000> : vector<256xf32>
    %28 = vector.multi_reduction <minimumf>, %25, %cst_11 [0] : vector<96x256xf32> to vector<256xf32>
    %29 = vector.shape_cast %28 : vector<256xf32> to vector<1x256xf32>
    %cst_12 = arith.constant 0.000000e+00 : f32
    %30 = vector.broadcast %cst_12 : f32 to vector<96x1xf32>
    %31 = arith.maximumf %27, %30 : vector<96x1xf32>
    %32 = math.sqrt %31 : vector<96x1xf32>
    %cst_13 = arith.constant 0.000000e+00 : f32
    %33 = vector.broadcast %cst_13 : f32 to vector<1x256xf32>
    %34 = arith.maximumf %29, %33 : vector<1x256xf32>
    %35 = math.sqrt %34 : vector<1x256xf32>
    %36 = tpu.iota {dimensions = array<i32: 0>} : vector<96x1xi32>
    %37 = vector.broadcast %4 : i32 to vector<96x1xi32>
    %38 = arith.cmpi slt, %36, %37 : vector<96x1xi32>
    %39 = tpu.iota {dimensions = array<i32: 1>} : vector<1x256xi32>
    %40 = vector.broadcast %8 : i32 to vector<1x256xi32>
    %41 = arith.cmpi slt, %39, %40 : vector<1x256xi32>
    %cst_14 = arith.constant 0.000000e+00 : f32
    %42 = vector.broadcast %cst_14 : f32 to vector<96x1xf32>
    %43 = arith.select %38, %32, %42 : vector<96x1xi1>, vector<96x1xf32>
    %cst_15 = arith.constant 0.000000e+00 : f32
    %44 = vector.broadcast %cst_15 : f32 to vector<1x256xf32>
    %45 = arith.select %41, %35, %44 : vector<1x256xi1>, vector<1x256xf32>
    %46 = arith.sitofp %4 : i32 to f32
    %cst_16 = arith.constant 1.000000e+00 : f32
    %47 = arith.divf %cst_16, %46 : f32
    %48 = arith.sitofp %8 : i32 to f32
    %cst_17 = arith.constant 1.000000e+00 : f32
    %49 = arith.divf %cst_17, %48 : f32
    %50 = vector.shape_cast %43 : vector<96x1xf32> to vector<1x96x1xf32>
    %cst_18 = arith.constant dense<0.000000e+00> : vector<1xf32>
    %51 = vector.multi_reduction <add>, %50, %cst_18 [1, 2] : vector<1x96x1xf32> to vector<1xf32>
    %52 = vector.shape_cast %51 : vector<1xf32> to vector<1x1x1xf32>
    %53 = vector.extract %52[0, 0, 0] : f32 from vector<1x1x1xf32>
    %54 = arith.mulf %53, %47 : f32
    %55 = vector.shape_cast %43 : vector<96x1xf32> to vector<1x96x1xf32>
    %cst_19 = arith.constant dense<0xFF800000> : vector<1xf32>
    %56 = vector.multi_reduction <maximumf>, %55, %cst_19 [1, 2] : vector<1x96x1xf32> to vector<1xf32>
    %57 = vector.shape_cast %56 : vector<1xf32> to vector<1x1x1xf32>
    %58 = vector.extract %57[0, 0, 0] : f32 from vector<1x1x1xf32>
    %59 = vector.shape_cast %45 : vector<1x256xf32> to vector<1x1x256xf32>
    %cst_20 = arith.constant dense<0.000000e+00> : vector<1xf32>
    %60 = vector.multi_reduction <add>, %59, %cst_20 [1, 2] : vector<1x1x256xf32> to vector<1xf32>
    %61 = vector.shape_cast %60 : vector<1xf32> to vector<1x1x1xf32>
    %62 = vector.extract %61[0, 0, 0] : f32 from vector<1x1x1xf32>
    %63 = arith.mulf %62, %49 : f32
    %cst_21 = arith.constant 5.000000e+00 : f32
    %64 = arith.mulf %cst_21, %63 : f32
    %65 = arith.addf %64, %54 : f32
    %66 = arith.addf %65, %58 : f32
    %67 = vector.broadcast %66 : f32 to vector<1x128xf32>
    %c2_i32_22 = arith.constant 2 : i32
    %68 = arith.muli %arg0, %c2_i32_22 : i32
    %c1_i32_23 = arith.constant 1 : i32
    %69 = arith.addi %68, %c1_i32_23 : i32
    %c2_i32_24 = arith.constant 2 : i32
    %70 = arith.muli %c2_i32_24, %69 : i32
    %71 = arith.index_cast %70 : i32 to index
    %72 = memref.load %arg1[%71] : memref<4xi32, #tpu.memory_space<smem>>
    %c2_i32_25 = arith.constant 2 : i32
    %73 = arith.muli %c2_i32_25, %69 : i32
    %c1_i32_26 = arith.constant 1 : i32
    %74 = arith.addi %73, %c1_i32_26 : i32
    %75 = arith.index_cast %74 : i32 to index
    %76 = memref.load %arg1[%75] : memref<4xi32, #tpu.memory_space<smem>>
    %c1 = arith.constant 1 : index
    %c0_27 = arith.constant 0 : index
    %c0_28 = arith.constant 0 : index
    %77 = vector.load %arg2[%c1, %c0_27, %c0_28] : memref<2x96x8xf32, #tpu.memory_space<vmem>>, vector<1x96x8xf32>
    %78 = vector.shape_cast %77 : vector<1x96x8xf32> to vector<96x8xf32>
    %c1_29 = arith.constant 1 : index
    %c0_30 = arith.constant 0 : index
    %c0_31 = arith.constant 0 : index
    %79 = vector.load %arg3[%c1_29, %c0_30, %c0_31] : memref<2x8x256xf32, #tpu.memory_space<vmem>>, vector<1x8x256xf32>
    %80 = vector.shape_cast %79 : vector<1x8x256xf32> to vector<8x256xf32>
    %81 = arith.mulf %78, %78 : vector<96x8xf32>
    %cst_32 = arith.constant dense<0.000000e+00> : vector<96xf32>
    %82 = vector.multi_reduction <add>, %81, %cst_32 [1] : vector<96x8xf32> to vector<96xf32>
    %83 = vector.shape_cast %82 : vector<96xf32> to vector<96x1xf32>
    %84 = arith.mulf %80, %80 : vector<8x256xf32>
    %cst_33 = arith.constant dense<0.000000e+00> : vector<256xf32>
    %85 = vector.multi_reduction <add>, %84, %cst_33 [0] : vector<8x256xf32> to vector<256xf32>
    %86 = vector.shape_cast %85 : vector<256xf32> to vector<1x256xf32>
    %cst_34 = arith.constant -2.000000e+00 : f32
    %87 = vector.broadcast %cst_34 : f32 to vector<96x8xf32>
    %88 = arith.mulf %78, %87 : vector<96x8xf32>
    %cst_35 = arith.constant dense<0.000000e+00> : vector<96x256xf32>
    %89 = tpu.matmul %88, %80, %cst_35 {dimension_numbers = #tpu.dot_dimension_numbers<[1], [0], [0], [1], [0, 0, 1, 1], [], []>} : vector<96x8xf32>, vector<8x256xf32>, vector<96x256xf32> -> vector<96x256xf32>
    %90 = vector.broadcast %83 : vector<96x1xf32> to vector<96x256xf32>
    %91 = vector.broadcast %86 : vector<1x256xf32> to vector<96x256xf32>
    %92 = arith.addf %90, %91 : vector<96x256xf32>
    %93 = arith.addf %92, %89 : vector<96x256xf32>
    %cst_36 = arith.constant dense<0x7F800000> : vector<96xf32>
    %94 = vector.multi_reduction <minimumf>, %93, %cst_36 [1] : vector<96x256xf32> to vector<96xf32>
    %95 = vector.shape_cast %94 : vector<96xf32> to vector<96x1xf32>
    %cst_37 = arith.constant dense<0x7F800000> : vector<256xf32>
    %96 = vector.multi_reduction <minimumf>, %93, %cst_37 [0] : vector<96x256xf32> to vector<256xf32>
    %97 = vector.shape_cast %96 : vector<256xf32> to vector<1x256xf32>
    %cst_38 = arith.constant 0.000000e+00 : f32
    %98 = vector.broadcast %cst_38 : f32 to vector<96x1xf32>
    %99 = arith.maximumf %95, %98 : vector<96x1xf32>
    %100 = math.sqrt %99 : vector<96x1xf32>
    %cst_39 = arith.constant 0.000000e+00 : f32
    %101 = vector.broadcast %cst_39 : f32 to vector<1x256xf32>
    %102 = arith.maximumf %97, %101 : vector<1x256xf32>
    %103 = math.sqrt %102 : vector<1x256xf32>
    %104 = tpu.iota {dimensions = array<i32: 0>} : vector<96x1xi32>
    %105 = vector.broadcast %72 : i32 to vector<96x1xi32>
    %106 = arith.cmpi slt, %104, %105 : vector<96x1xi32>
    %107 = tpu.iota {dimensions = array<i32: 1>} : vector<1x256xi32>
    %108 = vector.broadcast %76 : i32 to vector<1x256xi32>
    %109 = arith.cmpi slt, %107, %108 : vector<1x256xi32>
    %cst_40 = arith.constant 0.000000e+00 : f32
    %110 = vector.broadcast %cst_40 : f32 to vector<96x1xf32>
    %111 = arith.select %106, %100, %110 : vector<96x1xi1>, vector<96x1xf32>
    %cst_41 = arith.constant 0.000000e+00 : f32
    %112 = vector.broadcast %cst_41 : f32 to vector<1x256xf32>
    %113 = arith.select %109, %103, %112 : vector<1x256xi1>, vector<1x256xf32>
    %114 = arith.sitofp %72 : i32 to f32
    %cst_42 = arith.constant 1.000000e+00 : f32
    %115 = arith.divf %cst_42, %114 : f32
    %116 = arith.sitofp %76 : i32 to f32
    %cst_43 = arith.constant 1.000000e+00 : f32
    %117 = arith.divf %cst_43, %116 : f32
    %118 = vector.shape_cast %111 : vector<96x1xf32> to vector<1x96x1xf32>
    %cst_44 = arith.constant dense<0.000000e+00> : vector<1xf32>
    %119 = vector.multi_reduction <add>, %118, %cst_44 [1, 2] : vector<1x96x1xf32> to vector<1xf32>
    %120 = vector.shape_cast %119 : vector<1xf32> to vector<1x1x1xf32>
    %121 = vector.extract %120[0, 0, 0] : f32 from vector<1x1x1xf32>
    %122 = arith.mulf %121, %115 : f32
    %123 = vector.shape_cast %111 : vector<96x1xf32> to vector<1x96x1xf32>
    %cst_45 = arith.constant dense<0xFF800000> : vector<1xf32>
    %124 = vector.multi_reduction <maximumf>, %123, %cst_45 [1, 2] : vector<1x96x1xf32> to vector<1xf32>
    %125 = vector.shape_cast %124 : vector<1xf32> to vector<1x1x1xf32>
    %126 = vector.extract %125[0, 0, 0] : f32 from vector<1x1x1xf32>
    %127 = vector.shape_cast %113 : vector<1x256xf32> to vector<1x1x256xf32>
    %cst_46 = arith.constant dense<0.000000e+00> : vector<1xf32>
    %128 = vector.multi_reduction <add>, %127, %cst_46 [1, 2] : vector<1x1x256xf32> to vector<1xf32>
    %129 = vector.shape_cast %128 : vector<1xf32> to vector<1x1x1xf32>
    %130 = vector.extract %129[0, 0, 0] : f32 from vector<1x1x1xf32>
    %131 = arith.mulf %130, %117 : f32
    %cst_47 = arith.constant 5.000000e+00 : f32
    %132 = arith.mulf %cst_47, %131 : f32
    %133 = arith.addf %132, %122 : f32
    %134 = arith.addf %133, %126 : f32
    %135 = vector.broadcast %134 : f32 to vector<1x128xf32>
    %136 = tpu.concatenate %67, %135 in 0 : vector<1x128xf32>, vector<1x128xf32> -> vector<2x128xf32>
    %137 = vector.shape_cast %136 : vector<2x128xf32> to vector<1x2x128xf32>
    %c0_48 = arith.constant 0 : index
    %c0_49 = arith.constant 0 : index
    %c0_50 = arith.constant 0 : index
    %138 = vector.load %arg4[%c0_48, %c0_49, %c0_50] : memref<1x2x128xf32, #tpu.memory_space<vmem>>, vector<1x2x128xf32>
    tpu.vector_store %arg4[%c0_48, %c0_49, %c0_50], %137 {strides = array<i32>} : memref<1x2x128xf32, #tpu.memory_space<vmem>>, vector<1x2x128xf32>,
    return
  }
  func.func @transform_0(%arg0: i32, %arg1: memref<4xi32, #tpu.memory_space<smem>>) -> (i32, i32, i32) {
    %c0_i32 = arith.constant 0 : i32
    %c0_i32_0 = arith.constant 0 : i32
    %c0_i32_1 = arith.constant 0 : i32
    return %arg0, %c0_i32, %c0_i32_0 : i32, i32, i32
  }
  func.func @transform_1(%arg0: i32, %arg1: memref<4xi32, #tpu.memory_space<smem>>) -> (i32, i32, i32) {
    %c0_i32 = arith.constant 0 : i32
    %c0_i32_0 = arith.constant 0 : i32
    %c0_i32_1 = arith.constant 0 : i32
    return %arg0, %c0_i32, %c0_i32_0 : i32, i32, i32
  }
  func.func @transform_2(%arg0: i32, %arg1: memref<4xi32, #tpu.memory_space<smem>>) -> (i32, i32, i32) {
    %c0_i32 = arith.constant 0 : i32
    %c0_i32_0 = arith.constant 0 : i32
    %c0_i32_1 = arith.constant 0 : i32
    return %arg0, %c0_i32, %c0_i32_0 : i32, i32, i32
  }
}

</mosaic_0001>

<llo_original>
// kernel: tpu_custom_call.1
$region0: #{tpu_custom_call.1}
  #allocation0 [shape = 'u32[]', space=smem, size = 0x4, offset = 0x4, fixed_abs, tag = 'smem constant byte address 0x4 - core index']
  #allocation1 [shape = 'u32[144,128]{1,0:T(1,128)}', space=vmem, size = 0x12000, scoped, tag = 'internal scratch']
  #allocation2 [shape = 's32[1]{0}', space=sflag, size = 0x4, scoped, tag = 'scoped memory for tpu_custom_call.1']
  #allocation3 [shape = 'u8[512]{0}', space=smem, size = 0x200, scoped, tag = 'prefetched SMEM operand 0']
  %s0 = inlined_call_operand.vmem [shape: s32[4], index: 0, kind: input, shape index: {}]
  %s1 = inlined_call_operand.vmem [shape: f32[2,96,8], index: 1, kind: input, shape index: {}]
  %s2 = inlined_call_operand.vmem [shape: f32[2,8,256], index: 2, kind: input, shape index: {}]
  %s3 = inlined_call_operand.hbm [shape: f32[1,2,128], index: 3, kind: output, shape index: {}]
  %s4 = sld [smem:[#allocation0]]
  $region18: #{tpu_custom_call.1} parent=0
    _
  %s6 = ssub.s32 1, %s4
  %s7 = scalar_select 0, %s6, %s4
  %s8 = sshll.u32 %s0, 4
  %s9 = int_to_ptr.vmem [resolvable:$true] %s8
  %11 = dma.vmem_to_smem %s9, 16, [#allocation3], [#allocation2]
  %12 = dma.done [#allocation2], 16
  %13 = sfence
  $region1: #{tpu_custom_call.1} parent=0
    #allocation4 [shape = 'u8[1024]{0}', space=vmem, size = 0x400, scoped, tag = 'output window, operand 0, single buffered']
    #allocation5 [shape = 's32[1]{0}', space=sflag, size = 0x4, scoped, tag = 'scoped memory for tpu_custom_call.1']
    %14 = vsyncpa [#allocation5], 0
    // Predicated region
    $region2: #{tpu_custom_call.1} parent=1 // pred_check
      _
    $region3: #{tpu_custom_call.1} parent=1 // pred_check_branch
      %16 = sbr.rel (0) target = $region5
    $region4: #{tpu_custom_call.1} parent=1 // pred_region
      _
    $region5: #{tpu_custom_call.1} parent=1 // pred_fallthru
      _
    // Predicated region
    $region6: #{tpu_custom_call.1} parent=1 // pred_check
      _
    $region7: #{tpu_custom_call.1} parent=1 // pred_check_branch
      %18 = sbr.rel (0) target = $region9
    $region8: #{tpu_custom_call.1} parent=1 // pred_region
      _
    $region9: #{tpu_custom_call.1} parent=1 // pred_fallthru
      _
    %s19 = smul.u32 0, 4
    %s20 = sld [smem:[#allocation3 + %s19]]
    %s21 = sadd.s32 %s19, 1
    %s22 = sld [smem:[#allocation3 + %s21]]
    %v23 = vld [vmem:[%s1] sm:$0xff]
    %v24 = vld [vmem:[%s1 + $0x8] sm:$0xff]
    %v25 = vld [vmem:[%s1 + $0x10] sm:$0xff]
    %v26 = vld [vmem:[%s1 + $0x18] sm:$0xff]
    %v27 = vld [vmem:[%s1 + $0x20] sm:$0xff]
    %v28 = vld [vmem:[%s1 + $0x28] sm:$0xff]
    %v29 = vld [vmem:[%s1 + $0x30] sm:$0xff]
    %v30 = vld [vmem:[%s1 + $0x38] sm:$0xff]
    %v31 = vld [vmem:[%s1 + $0x40] sm:$0xff]
    %v32 = vld [vmem:[%s1 + $0x48] sm:$0xff]
    %v33 = vld [vmem:[%s1 + $0x50] sm:$0xff]
    %v34 = vld [vmem:[%s1 + $0x58] sm:$0xff]
    %v35 = vld [vmem:[%s2] sm:$0xff]
    %v36 = vld [vmem:[%s2 + $0x8] sm:$0xff]
    %v37 = vmul.f32 %v23, %v23
    %v38 = vmul.f32 %v24, %v24
    %v39 = vmul.f32 %v25, %v25
    %v40 = vmul.f32 %v26, %v26
    %v41 = vmul.f32 %v27, %v27
    %v42 = vmul.f32 %v28, %v28
    %v43 = vmul.f32 %v29, %v29
    %v44 = vmul.f32 %v30, %v30
    %v45 = vmul.f32 %v31, %v31
    %v46 = vmul.f32 %v32, %v32
    %v47 = vmul.f32 %v33, %v33
    %v48 = vmul.f32 %v34, %v34
    %vm49 = vcmask 64512
    %v50 = vsel %vm49, %v37, 0.0
    %51 = vadd.xlane.f32.xlu0 %v50
    %v52 = vpop.xlane.xlu0 %51
    %v53 = vsel %vm49, %v38, 0.0
    %54 = vadd.xlane.f32.xlu0 %v53
    %v55 = vpop.xlane.xlu0 %54
    %v56 = vsel %vm49, %v39, 0.0
    %57 = vadd.xlane.f32.xlu0 %v56
    %v58 = vpop.xlane.xlu0 %57
    %v59 = vsel %vm49, %v40, 0.0
    %60 = vadd.xlane.f32.xlu0 %v59
    %v61 = vpop.xlane.xlu0 %60
    %v62 = vsel %vm49, %v41, 0.0
    %63 = vadd.xlane.f32.xlu0 %v62
    %v64 = vpop.xlane.xlu0 %63
    %v65 = vsel %vm49, %v42, 0.0
    %66 = vadd.xlane.f32.xlu0 %v65
    %v67 = vpop.xlane.xlu0 %66
    %v68 = vsel %vm49, %v43, 0.0
    %69 = vadd.xlane.f32.xlu0 %v68
    %v70 = vpop.xlane.xlu0 %69
    %v71 = vsel %vm49, %v44, 0.0
    %72 = vadd.xlane.f32.xlu0 %v71
    %v73 = vpop.xlane.xlu0 %72
    %v74 = vsel %vm49, %v45, 0.0
    %75 = vadd.xlane.f32.xlu0 %v74
    %v76 = vpop.xlane.xlu0 %75
    %v77 = vsel %vm49, %v46, 0.0
    %78 = vadd.xlane.f32.xlu0 %v77
    %v79 = vpop.xlane.xlu0 %78
    %v80 = vsel %vm49, %v47, 0.0
    %81 = vadd.xlane.f32.xlu0 %v80
    %v82 = vpop.xlane.xlu0 %81
    %v83 = vsel %vm49, %v48, 0.0
    %84 = vadd.xlane.f32.xlu0 %v83
    %v85 = vpop.xlane.xlu0 %84
    %v86 = vmul.f32 %v35, %v35
    %v87 = vmul.f32 %v36, %v36
    %v88 = vrot.slane %v86, 4
    %v89 = vadd.f32 %v86, %v88
    %v90 = vrot.slane %v89, 2
    %v91 = vadd.f32 %v89, %v90
    %v92 = vrot.slane %v91, 1
    %v93 = vadd.f32 %v91, %v92
    %v94 = vrot.slane %v87, 4
    %v95 = vadd.f32 %v87, %v94
    %v96 = vrot.slane %v95, 2
    %v97 = vadd.f32 %v95, %v96
    %v98 = vrot.slane %v97, 1
    %v99 = vadd.f32 %v97, %v98
    %v100 = vmul.f32 %v23, -2.0
    %v101 = vmul.f32 %v24, -2.0
    %v102 = vmul.f32 %v25, -2.0
    %v103 = vmul.f32 %v26, -2.0
    %v104 = vmul.f32 %v27, -2.0
    %v105 = vmul.f32 %v28, -2.0
    %v106 = vmul.f32 %v29, -2.0
    %v107 = vmul.f32 %v30, -2.0
    %v108 = vmul.f32 %v31, -2.0
    %v109 = vmul.f32 %v32, -2.0
    %v110 = vmul.f32 %v33, -2.0
    %v111 = vmul.f32 %v34, -2.0
    %v113 = vsel %vm49, %v100, 0
    %v116 = vsel %vm49, %v101, 0
    %v119 = vsel %vm49, %v102, 0
    %v122 = vsel %vm49, %v103, 0
    %v125 = vsel %vm49, %v104, 0
    %v128 = vsel %vm49, %v105, 0
    %v131 = vsel %vm49, %v106, 0
    %v134 = vsel %vm49, %v107, 0
    %v137 = vsel %vm49, %v108, 0
    %v140 = vsel %vm49, %v109, 0
    %v143 = vsel %vm49, %v110, 0
    %v146 = vsel %vm49, %v111, 0
    %148 = vmatprep.subr.mxu0 %v36
    %149 = vmatpush1.msra.mxu0 %v35
    %150 = vmatprep.subr.mxu0 0.0
    %151 = vmatpush1.msra.mxu0 0.0
    %152 = vmatprep.subr.mxu0 0.0
    %153 = vmatpush1.msra.mxu0 0.0
    %154 = vmatprep.subr.mxu0 0.0
    %155 = vmatpush1.msra.mxu0 0.0
    %156 = vmatprep.subr.mxu0 0.0
    %157 = vmatpush1.msra.mxu0 0.0
    %158 = vmatprep.subr.mxu0 0.0
    %159 = vmatpush1.msra.mxu0 0.0
    %160 = vmatprep.subr.mxu0 0.0
    %161 = vmatpush1.msra.mxu0 0.0
    %162 = vmatprep.subr.mxu0 0.0
    %163 = vmatpush1.msra.mxu0 0.0
    %164 = vmatprep.subr.mxu0 0.0
    %165 = vmatpush1.msra.mxu0 0.0
    %166 = vmatprep.subr.mxu0 0.0
    %167 = vmatpush1.msra.mxu0 0.0
    %168 = vmatprep.subr.mxu0 0.0
    %169 = vmatpush1.msra.mxu0 0.0
    %170 = vmatprep.subr.mxu0 0.0
    %171 = vmatpush1.msra.mxu0 0.0
    %172 = vmatprep.subr.mxu0 0.0
    %173 = vmatpush1.msra.mxu0 0.0
    %174 = vmatprep.subr.mxu0 0.0
    %175 = vmatpush1.msra.mxu0 0.0
    %176 = vmatprep.subr.mxu0 0.0
    %177 = vmatpush1.msra.mxu0 0.0
    %178 = vmatprep.subr.mxu0 0.0
    %179 = vmatpush1.msra.mxu0 0.0
    %180 = vmatprep.subr.mxu0 0.0
    %181 = vmatpush1.msra.mxu0 0.0
    %182 = vmatprep.subr.mxu0 0.0
    %183 = vmatpush1.msra.mxu0 0.0
    %184 = vmatprep.subr.mxu0 0.0
    %185 = vmatpush1.msra.mxu0 0.0
    %186 = vmatprep.subr.mxu0 0.0
    %187 = vmatpush1.msra.mxu0 0.0
    %188 = vmatprep.subr.mxu0 0.0
    %189 = vmatpush1.msra.mxu0 0.0
    %190 = vmatprep.subr.mxu0 0.0
    %191 = vmatpush1.msra.mxu0 0.0
    %192 = vmatprep.subr.mxu0 0.0
    %193 = vmatpush1.msra.mxu0 0.0
    %194 = vmatprep.subr.mxu0 0.0
    %195 = vmatpush1.msra.mxu0 0.0
    %196 = vmatprep.subr.mxu0 0.0
    %197 = vmatpush1.msra.mxu0 0.0
    %198 = vmatprep.subr.mxu0 0.0
    %199 = vmatpush1.msra.mxu0 0.0
    %200 = vmatprep.subr.mxu0 0.0
    %201 = vmatpush1.msra.mxu0 0.0
    %202 = vmatprep.subr.mxu0 0.0
    %203 = vmatpush1.msra.mxu0 0.0
    %204 = vmatprep.subr.mxu0 0.0
    %205 = vmatpush1.msra.mxu0 0.0
    %206 = vmatprep.subr.mxu0 0.0
    %207 = vmatpush1.msra.mxu0 0.0
    %208 = vmatprep.subr.mxu0 0.0
    %209 = vmatpush1.msra.mxu0 0.0
    %210 = vmatprep.subr.mxu0 0.0
    %211 = vmatpush1.msra.mxu0 0.0
    %212 = vmatprep.mubr.f32.mxu0 0.0
    %213 = vmatmul.mubr.f32.gmra.mrb[0].mxu0 %v113
    %v214 = vpop.f32.mrb[0].mxu0
    %v215 = vadd.f32 0.0, %v214
    %v216 = vpop.f32.mrb[0].mxu0
    %v217 = vadd.f32 0.0, %v216
    %218 = vmatprep.mubr.f32.mxu0 0.0
    %219 = vmatmul.mubr.f32.gmra.mrb[0].mxu0 %v116
    %v220 = vpop.f32.mrb[0].mxu0
    %v221 = vadd.f32 0.0, %v220
    %v222 = vpop.f32.mrb[0].mxu0
    %v223 = vadd.f32 0.0, %v222
    %224 = vmatprep.mubr.f32.mxu0 0.0
    %225 = vmatmul.mubr.f32.gmra.mrb[0].mxu0 %v119
    %v226 = vpop.f32.mrb[0].mxu0
    %v227 = vadd.f32 0.0, %v226
    %v228 = vpop.f32.mrb[0].mxu0
    %v229 = vadd.f32 0.0, %v228
    %230 = vmatprep.mubr.f32.mxu0 0.0
    %231 = vmatmul.mubr.f32.gmra.mrb[0].mxu0 %v122
    %v232 = vpop.f32.mrb[0].mxu0
    %v233 = vadd.f32 0.0, %v232
    %v234 = vpop.f32.mrb[0].mxu0
    %v235 = vadd.f32 0.0, %v234
    %236 = vmatprep.mubr.f32.mxu0 0.0
    %237 = vmatmul.mubr.f32.gmra.mrb[0].mxu0 %v125
    %v238 = vpop.f32.mrb[0].mxu0
    %v239 = vadd.f32 0.0, %v238
    %v240 = vpop.f32.mrb[0].mxu0
    %v241 = vadd.f32 0.0, %v240
    %242 = vmatprep.mubr.f32.mxu0 0.0
    %243 = vmatmul.mubr.f32.gmra.mrb[0].mxu0 %v128
    %v244 = vpop.f32.mrb[0].mxu0
    %v245 = vadd.f32 0.0, %v244
    %v246 = vpop.f32.mrb[0].mxu0
    %v247 = vadd.f32 0.0, %v246
    %248 = vmatprep.mubr.f32.mxu0 0.0
    %249 = vmatmul.mubr.f32.gmra.mrb[0].mxu0 %v131
    %v250 = vpop.f32.mrb[0].mxu0
    %v251 = vadd.f32 0.0, %v250
    %v252 = vpop.f32.mrb[0].mxu0
    %v253 = vadd.f32 0.0, %v252
    %254 = vmatprep.mubr.f32.mxu0 0.0
    %255 = vmatmul.mubr.f32.gmra.mrb[0].mxu0 %v134
    %v256 = vpop.f32.mrb[0].mxu0
    %v257 = vadd.f32 0.0, %v256
    %v258 = vpop.f32.mrb[0].mxu0
    %v259 = vadd.f32 0.0, %v258
    %260 = vmatprep.mubr.f32.mxu0 0.0
    %261 = vmatmul.mubr.f32.gmra.mrb[0].mxu0 %v137
    %v262 = vpop.f32.mrb[0].mxu0
    %v263 = vadd.f32 0.0, %v262
    %v264 = vpop.f32.mrb[0].mxu0
    %v265 = vadd.f32 0.0, %v264
    %266 = vmatprep.mubr.f32.mxu0 0.0
    %267 = vmatmul.mubr.f32.gmra.mrb[0].mxu0 %v140
    %v268 = vpop.f32.mrb[0].mxu0
    %v269 = vadd.f32 0.0, %v268
    %v270 = vpop.f32.mrb[0].mxu0
    %v271 = vadd.f32 0.0, %v270
    %272 = vmatprep.mubr.f32.mxu0 0.0
    %273 = vmatmul.mubr.f32.gmra.mrb[0].mxu0 %v143
    %v274 = vpop.f32.mrb[0].mxu0
    %v275 = vadd.f32 0.0, %v274
    %v276 = vpop.f32.mrb[0].mxu0
    %v277 = vadd.f32 0.0, %v276
    %278 = vmatprep.mubr.f32.mxu0 0.0
    %279 = vmatmul.mubr.f32.gmra.mrb[0].mxu0 %v146
    %v280 = vpop.f32.mrb[0].mxu0
    %v281 = vadd.f32 0.0, %v280
    %v282 = vpop.f32.mrb[0].mxu0
    %v283 = vadd.f32 0.0, %v282
    %284 = vdwg.mxu0
    %v285 = vadd.f32 %v52, %v93
    %v286 = vadd.f32 %v52, %v99
    %v287 = vadd.f32 %v55, %v93
    %v288 = vadd.f32 %v55, %v99
    %v289 = vadd.f32 %v58, %v93
    %v290 = vadd.f32 %v58, %v99
    %v291 = vadd.f32 %v61, %v93
    %v292 = vadd.f32 %v61, %v99
    %v293 = vadd.f32 %v64, %v93
    %v294 = vadd.f32 %v64, %v99
    %v295 = vadd.f32 %v67, %v93
    %v296 = vadd.f32 %v67, %v99
    %v297 = vadd.f32 %v70, %v93
    %v298 = vadd.f32 %v70, %v99
    %v299 = vadd.f32 %v73, %v93
    %v300 = vadd.f32 %v73, %v99
    %v301 = vadd.f32 %v76, %v93
    %v302 = vadd.f32 %v76, %v99
    %v303 = vadd.f32 %v79, %v93
    %v304 = vadd.f32 %v79, %v99
    %v305 = vadd.f32 %v82, %v93
    %v306 = vadd.f32 %v82, %v99
    %v307 = vadd.f32 %v85, %v93
    %v308 = vadd.f32 %v85, %v99
    %v309 = vadd.f32 %v285, %v215
    %v310 = vadd.f32 %v286, %v217
    %v311 = vadd.f32 %v287, %v221
    %v312 = vadd.f32 %v288, %v223
    %v313 = vadd.f32 %v289, %v227
    %v314 = vadd.f32 %v290, %v229
    %v315 = vadd.f32 %v291, %v233
    %v316 = vadd.f32 %v292, %v235
    %v317 = vadd.f32 %v293, %v239
    %v318 = vadd.f32 %v294, %v241
    %v319 = vadd.f32 %v295, %v245
    %v320 = vadd.f32 %v296, %v247
    %v321 = vadd.f32 %v297, %v251
    %v322 = vadd.f32 %v298, %v253
    %v323 = vadd.f32 %v299, %v257
    %v324 = vadd.f32 %v300, %v259
    %v325 = vadd.f32 %v301, %v263
    %v326 = vadd.f32 %v302, %v265
    %v327 = vadd.f32 %v303, %v269
    %v328 = vadd.f32 %v304, %v271
    %v329 = vadd.f32 %v305, %v275
    %v330 = vadd.f32 %v306, %v277
    %v331 = vadd.f32 %v307, %v281
    %v332 = vadd.f32 %v308, %v283
    %v333 = vmin.f32 %v309, %v310
    %334 = vmin.xlane.f32.xlu0 %v333
    %v335 = vpop.xlane.xlu0 %334
    %v336 = vmin.f32 %v311, %v312
    %337 = vmin.xlane.f32.xlu0 %v336
    %v338 = vpop.xlane.xlu0 %337
    %v339 = vmin.f32 %v313, %v314
    %340 = vmin.xlane.f32.xlu0 %v339
    %v341 = vpop.xlane.xlu0 %340
    %v342 = vmin.f32 %v315, %v316
    %343 = vmin.xlane.f32.xlu0 %v342
    %v344 = vpop.xlane.xlu0 %343
    %v345 = vmin.f32 %v317, %v318
    %346 = vmin.xlane.f32.xlu0 %v345
    %v347 = vpop.xlane.xlu0 %346
    %v348 = vmin.f32 %v319, %v320
    %349 = vmin.xlane.f32.xlu0 %v348
    %v350 = vpop.xlane.xlu0 %349
    %v351 = vmin.f32 %v321, %v322
    %352 = vmin.xlane.f32.xlu0 %v351
    %v353 = vpop.xlane.xlu0 %352
    %v354 = vmin.f32 %v323, %v324
    %355 = vmin.xlane.f32.xlu0 %v354
    %v356 = vpop.xlane.xlu0 %355
    %v357 = vmin.f32 %v325, %v326
    %358 = vmin.xlane.f32.xlu0 %v357
    %v359 = vpop.xlane.xlu0 %358
    %v360 = vmin.f32 %v327, %v328
    %361 = vmin.xlane.f32.xlu0 %v360
    %v362 = vpop.xlane.xlu0 %361
    %v363 = vmin.f32 %v329, %v330
    %364 = vmin.xlane.f32.xlu0 %v363
    %v365 = vpop.xlane.xlu0 %364
    %v366 = vmin.f32 %v331, %v332
    %367 = vmin.xlane.f32.xlu0 %v366
    %v368 = vpop.xlane.xlu0 %367
    %v369 = vmin.f32 %v309, %v313
    %v370 = vmin.f32 %v311, %v315
    %v371 = vmin.f32 %v369, %v317
    %v372 = vmin.f32 %v370, %v319
    %v373 = vmin.f32 %v371, %v321
    %v374 = vmin.f32 %v372, %v323
    %v375 = vmin.f32 %v373, %v325
    %v376 = vmin.f32 %v374, %v327
    %v377 = vmin.f32 %v375, %v329
    %v378 = vmin.f32 %v376, %v331
    %v379 = vmin.f32 %v377, %v378
    %v380 = vrot.slane %v379, 4
    %v381 = vmin.f32 %v379, %v380
    %v382 = vrot.slane %v381, 2
    %v383 = vmin.f32 %v381, %v382
    %v384 = vrot.slane %v383, 1
    %v385 = vmin.f32 %v383, %v384
    %v386 = vmin.f32 %v310, %v314
    %v387 = vmin.f32 %v312, %v316
    %v388 = vmin.f32 %v386, %v318
    %v389 = vmin.f32 %v387, %v320
    %v390 = vmin.f32 %v388, %v322
    %v391 = vmin.f32 %v389, %v324
    %v392 = vmin.f32 %v390, %v326
    %v393 = vmin.f32 %v391, %v328
    %v394 = vmin.f32 %v392, %v330
    %v395 = vmin.f32 %v393, %v332
    %v396 = vmin.f32 %v394, %v395
    %v397 = vrot.slane %v396, 4
    %v398 = vmin.f32 %v396, %v397
    %v399 = vrot.slane %v398, 2
    %v400 = vmin.f32 %v398, %v399
    %v401 = vrot.slane %v400, 1
    %v402 = vmin.f32 %v400, %v401
    %v403 = vmax.f32 %v335, 0.0
    %v404 = vmax.f32 %v338, 0.0
    %v405 = vmax.f32 %v341, 0.0
    %v406 = vmax.f32 %v344, 0.0
    %v407 = vmax.f32 %v347, 0.0
    %v408 = vmax.f32 %v350, 0.0
    %v409 = vmax.f32 %v353, 0.0
    %v410 = vmax.f32 %v356, 0.0
    %v411 = vmax.f32 %v359, 0.0
    %v412 = vmax.f32 %v362, 0.0
    %v413 = vmax.f32 %v365, 0.0
    %v414 = vmax.f32 %v368, 0.0
    %v415 = vrsqrt.pop %v403
    %v416 = vmul.f32 %v403, %v415
    %vm417 = vcmp.eq.f32.partialorder %v403, inf
    %v418 = vsel %vm417, %v403, %v416
    %vm419 = vcmp.eq.f32.partialorder %v403, 0.0
    %v420 = vand.u32 %v403, 2147483648
    %v421 = vsel %vm419, %v420, %v418
    %v422 = vrsqrt.pop %v404
    %v423 = vmul.f32 %v404, %v422
    %vm424 = vcmp.eq.f32.partialorder %v404, inf
    %v425 = vsel %vm424, %v404, %v423
    %vm426 = vcmp.eq.f32.partialorder %v404, 0.0
    %v427 = vand.u32 %v404, 2147483648
    %v428 = vsel %vm426, %v427, %v425
    %v429 = vrsqrt.pop %v405
    %v430 = vmul.f32 %v405, %v429
    %vm431 = vcmp.eq.f32.partialorder %v405, inf
    %v432 = vsel %vm431, %v405, %v430
    %vm433 = vcmp.eq.f32.partialorder %v405, 0.0
    %v434 = vand.u32 %v405, 2147483648
    %v435 = vsel %vm433, %v434, %v432
    %v436 = vrsqrt.pop %v406
    %v437 = vmul.f32 %v406, %v436
    %vm438 = vcmp.eq.f32.partialorder %v406, inf
    %v439 = vsel %vm438, %v406, %v437
    %vm440 = vcmp.eq.f32.partialorder %v406, 0.0
    %v441 = vand.u32 %v406, 2147483648
    %v442 = vsel %vm440, %v441, %v439
    %v443 = vrsqrt.pop %v407
    %v444 = vmul.f32 %v407, %v443
    %vm445 = vcmp.eq.f32.partialorder %v407, inf
    %v446 = vsel %vm445, %v407, %v444
    %vm447 = vcmp.eq.f32.partialorder %v407, 0.0
    %v448 = vand.u32 %v407, 2147483648
    %v449 = vsel %vm447, %v448, %v446
    %v450 = vrsqrt.pop %v408
    %v451 = vmul.f32 %v408, %v450
    %vm452 = vcmp.eq.f32.partialorder %v408, inf
    %v453 = vsel %vm452, %v408, %v451
    %vm454 = vcmp.eq.f32.partialorder %v408, 0.0
    %v455 = vand.u32 %v408, 2147483648
    %v456 = vsel %vm454, %v455, %v453
    %v457 = vrsqrt.pop %v409
    %v458 = vmul.f32 %v409, %v457
    %vm459 = vcmp.eq.f32.partialorder %v409, inf
    %v460 = vsel %vm459, %v409, %v458
    %vm461 = vcmp.eq.f32.partialorder %v409, 0.0
    %v462 = vand.u32 %v409, 2147483648
    %v463 = vsel %vm461, %v462, %v460
    %v464 = vrsqrt.pop %v410
    %v465 = vmul.f32 %v410, %v464
    %vm466 = vcmp.eq.f32.partialorder %v410, inf
    %v467 = vsel %vm466, %v410, %v465
    %vm468 = vcmp.eq.f32.partialorder %v410, 0.0
    %v469 = vand.u32 %v410, 2147483648
    %v470 = vsel %vm468, %v469, %v467
    %v471 = vrsqrt.pop %v411
    %v472 = vmul.f32 %v411, %v471
    %vm473 = vcmp.eq.f32.partialorder %v411, inf
    %v474 = vsel %vm473, %v411, %v472
    %vm475 = vcmp.eq.f32.partialorder %v411, 0.0
    %v476 = vand.u32 %v411, 2147483648
    %v477 = vsel %vm475, %v476, %v474
    %v478 = vrsqrt.pop %v412
    %v479 = vmul.f32 %v412, %v478
    %vm480 = vcmp.eq.f32.partialorder %v412, inf
    %v481 = vsel %vm480, %v412, %v479
    %vm482 = vcmp.eq.f32.partialorder %v412, 0.0
    %v483 = vand.u32 %v412, 2147483648
    %v484 = vsel %vm482, %v483, %v481
    %v485 = vrsqrt.pop %v413
    %v486 = vmul.f32 %v413, %v485
    %vm487 = vcmp.eq.f32.partialorder %v413, inf
    %v488 = vsel %vm487, %v413, %v486
    %vm489 = vcmp.eq.f32.partialorder %v413, 0.0
    %v490 = vand.u32 %v413, 2147483648
    %v491 = vsel %vm489, %v490, %v488
    %v492 = vrsqrt.pop %v414
    %v493 = vmul.f32 %v414, %v492
    %vm494 = vcmp.eq.f32.partialorder %v414, inf
    %v495 = vsel %vm494, %v414, %v493
    %vm496 = vcmp.eq.f32.partialorder %v414, 0.0
    %v497 = vand.u32 %v414, 2147483648
    %v498 = vsel %vm496, %v497, %v495
    %v499 = vmax.f32 %v385, 0.0
    %v500 = vmax.f32 %v402, 0.0
    %v501 = vrsqrt.pop %v499
    %v502 = vmul.f32 %v499, %v501
    %vm503 = vcmp.eq.f32.partialorder %v499, inf
    %v504 = vsel %vm503, %v499, %v502
    %vm505 = vcmp.eq.f32.partialorder %v499, 0.0
    %v506 = vand.u32 %v499, 2147483648
    %v507 = vsel %vm505, %v506, %v504
    %v508 = vrsqrt.pop %v500
    %v509 = vmul.f32 %v500, %v508
    %vm510 = vcmp.eq.f32.partialorder %v500, inf
    %v511 = vsel %vm510, %v500, %v509
    %vm512 = vcmp.eq.f32.partialorder %v500, 0.0
    %v513 = vand.u32 %v500, 2147483648
    %v514 = vsel %vm512, %v513, %v511
    %v515 = vlaneseq
    %v516 = vshrl.u32 %v515, 7
    %v517 = vadd.s32 %v516, 8
    %v518 = vadd.s32 %v516, 16
    %v519 = vadd.s32 %v516, 24
    %v520 = vadd.s32 %v516, 32
    %v521 = vadd.s32 %v516, 40
    %v522 = vadd.s32 %v516, 48
    %v523 = vadd.s32 %v516, 56
    %v524 = vadd.s32 %v516, 64
    %v525 = vadd.s32 %v516, 72
    %v526 = vadd.s32 %v516, 80
    %v527 = vadd.s32 %v516, 88
    %v528 = vstv %s20
    %vm529 = vcmp.lt.s32.totalorder %v516, %v528
    %vm530 = vcmp.lt.s32.totalorder %v517, %v528
    %vm531 = vcmp.lt.s32.totalorder %v518, %v528
    %vm532 = vcmp.lt.s32.totalorder %v519, %v528
    %vm533 = vcmp.lt.s32.totalorder %v520, %v528
    %vm534 = vcmp.lt.s32.totalorder %v521, %v528
    %vm535 = vcmp.lt.s32.totalorder %v522, %v528
    %vm536 = vcmp.lt.s32.totalorder %v523, %v528
    %vm537 = vcmp.lt.s32.totalorder %v524, %v528
    %vm538 = vcmp.lt.s32.totalorder %v525, %v528
    %vm539 = vcmp.lt.s32.totalorder %v526, %v528
    %vm540 = vcmp.lt.s32.totalorder %v527, %v528
    %v541 = vlaneseq
    %v542 = vand.u32 %v541, 127
    %v543 = vadd.s32 %v542, 128
    %v544 = vstv %s22
    %vm545 = vcmp.lt.s32.totalorder %v542, %v544
    %vm546 = vcmp.lt.s32.totalorder %v543, %v544
    %v547 = vsel %vm529, %v421, 0.0
    %v548 = vsel %vm530, %v428, 0.0
    %v549 = vsel %vm531, %v435, 0.0
    %v550 = vsel %vm532, %v442, 0.0
    %v551 = vsel %vm533, %v449, 0.0
    %v552 = vsel %vm534, %v456, 0.0
    %v553 = vsel %vm535, %v463, 0.0
    %v554 = vsel %vm536, %v470, 0.0
    %v555 = vsel %vm537, %v477, 0.0
    %v556 = vsel %vm538, %v484, 0.0
    %v557 = vsel %vm539, %v491, 0.0
    %v558 = vsel %vm540, %v498, 0.0
    %v559 = vsel %vm545, %v507, 0.0
    %v560 = vsel %vm546, %v514, 0.0
    %s561 = scvt.s32.f32 %s20
    %v562 = vstv %s561
    %v563 = vrcp.pop %v562
    %s564 = vtos %v563
    %s565 = scvt.s32.f32 %s22
    %v566 = vstv %s565
    %v567 = vrcp.pop %v566
    %s568 = vtos %v567
    %vm569 = vcmask 7168
    %v570 = vsel %vm569, %v547, 0.0
    %v571 = vsel %vm569, %v548, 0.0
    %v572 = vadd.f32 %v570, %v571
    %v573 = vsel %vm569, %v549, 0.0
    %v574 = vadd.f32 %v572, %v573
    %v575 = vsel %vm569, %v550, 0.0
    %v576 = vadd.f32 %v574, %v575
    %v577 = vsel %vm569, %v551, 0.0
    %v578 = vadd.f32 %v576, %v577
    %v579 = vsel %vm569, %v552, 0.0
    %v580 = vadd.f32 %v578, %v579
    %v581 = vsel %vm569, %v553, 0.0
    %v582 = vadd.f32 %v580, %v581
    %v583 = vsel %vm569, %v554, 0.0
    %v584 = vadd.f32 %v582, %v583
    %v585 = vsel %vm569, %v555, 0.0
    %v586 = vadd.f32 %v584, %v585
    %v587 = vsel %vm569, %v556, 0.0
    %v588 = vadd.f32 %v586, %v587
    %v589 = vsel %vm569, %v557, 0.0
    %v590 = vadd.f32 %v588, %v589
    %v591 = vsel %vm569, %v558, 0.0
    %v592 = vadd.f32 %v590, %v591
    %593 = vadd.xlane.f32.xlu0 %v592
    %v594 = vpop.xlane.xlu0 %593
    %v595 = vrot.slane %v594, 4
    %v596 = vadd.f32 %v594, %v595
    %v597 = vrot.slane %v596, 2
    %v598 = vadd.f32 %v596, %v597
    %v599 = vrot.slane %v598, 1
    %v600 = vadd.f32 %v598, %v599
    %s601 = vtos %v600
    %s602 = smul.f32 %s601, %s564
    %v603 = vmax.f32 %v547, %v551
    %v604 = vmax.f32 %v548, %v552
    %v605 = vmax.f32 %v549, %v553
    %v606 = vmax.f32 %v550, %v554
    %v607 = vmax.f32 %v603, %v555
    %v608 = vmax.f32 %v604, %v556
    %v609 = vmax.f32 %v605, %v557
    %v610 = vmax.f32 %v606, %v558
    %v611 = vmax.f32 %v607, %v608
    %v612 = vmax.f32 %v609, %v610
    %v613 = vmax.f32 %v611, %v612
    %v614 = vrot.slane %v613, 4
    %v615 = vmax.f32 %v613, %v614
    %v616 = vrot.slane %v615, 2
    %v617 = vmax.f32 %v615, %v616
    %v618 = vrot.slane %v617, 1
    %v619 = vmax.f32 %v617, %v618
    %s620 = vtos %v619
    %vm621 = vcmask 1040384
    %v622 = vsel %vm621, %v559, 0.0
    %v623 = vsel %vm621, %v560, 0.0
    %v624 = vadd.f32 %v622, %v623
    %625 = vadd.xlane.f32.xlu0 %v624
    %v626 = vpop.xlane.xlu0 %625
    %v627 = vrot.slane %v626, 4
    %v628 = vadd.f32 %v626, %v627
    %v629 = vrot.slane %v628, 2
    %v630 = vadd.f32 %v628, %v629
    %v631 = vrot.slane %v630, 1
    %v632 = vadd.f32 %v630, %v631
    %s633 = vtos %v632
    %s634 = smul.f32 %s633, %s568
    %s635 = smul.f32 %s634, 5.0
    %s636 = sadd.f32 %s635, %s602
    %s637 = sadd.f32 %s636, %s620
    %v638 = vstv %s637
    %s639 = smul.u32 0, 2
    %s640 = sadd.s32 %s639, 1
    %s641 = smul.u32 %s640, 2
    %s642 = sld [smem:[#allocation3 + %s641]]
    %s643 = sadd.s32 %s641, 1
    %s644 = sld [smem:[#allocation3 + %s643]]
    %s645 = scalar_lea.vmem %s1, 96
    %v646 = vld [vmem:[%s645] sm:$0xff]
    %v647 = vld [vmem:[%s645 + $0x8] sm:$0xff]
    %v648 = vld [vmem:[%s645 + $0x10] sm:$0xff]
    %v649 = vld [vmem:[%s645 + $0x18] sm:$0xff]
    %v650 = vld [vmem:[%s645 + $0x20] sm:$0xff]
    %v651 = vld [vmem:[%s645 + $0x28] sm:$0xff]
    %v652 = vld [vmem:[%s645 + $0x30] sm:$0xff]
    %v653 = vld [vmem:[%s645 + $0x38] sm:$0xff]
    %v654 = vld [vmem:[%s645 + $0x40] sm:$0xff]
    %v655 = vld [vmem:[%s645 + $0x48] sm:$0xff]
    %v656 = vld [vmem:[%s645 + $0x50] sm:$0xff]
    %v657 = vld [vmem:[%s645 + $0x58] sm:$0xff]
    %s658 = scalar_lea.vmem %s2, 16
    %v659 = vld [vmem:[%s658] sm:$0xff]
    %v660 = vld [vmem:[%s658 + $0x8] sm:$0xff]
    %v661 = vmul.f32 %v646, %v646
    %v662 = vmul.f32 %v647, %v647
    %v663 = vmul.f32 %v648, %v648
    %v664 = vmul.f32 %v649, %v649
    %v665 = vmul.f32 %v650, %v650
    %v666 = vmul.f32 %v651, %v651
    %v667 = vmul.f32 %v652, %v652
    %v668 = vmul.f32 %v653, %v653
    %v669 = vmul.f32 %v654, %v654
    %v670 = vmul.f32 %v655, %v655
    %v671 = vmul.f32 %v656, %v656
    %v672 = vmul.f32 %v657, %v657
    %v673 = vsel %vm49, %v661, 0.0
    %674 = vadd.xlane.f32.xlu0 %v673
    %v675 = vpop.xlane.xlu0 %674
    %v676 = vsel %vm49, %v662, 0.0
    %677 = vadd.xlane.f32.xlu0 %v676
    %v678 = vpop.xlane.xlu0 %677
    %v679 = vsel %vm49, %v663, 0.0
    %680 = vadd.xlane.f32.xlu0 %v679
    %v681 = vpop.xlane.xlu0 %680
    %v682 = vsel %vm49, %v664, 0.0
    %683 = vadd.xlane.f32.xlu0 %v682
    %v684 = vpop.xlane.xlu0 %683
    %v685 = vsel %vm49, %v665, 0.0
    %686 = vadd.xlane.f32.xlu0 %v685
    %v687 = vpop.xlane.xlu0 %686
    %v688 = vsel %vm49, %v666, 0.0
    %689 = vadd.xlane.f32.xlu0 %v688
    %v690 = vpop.xlane.xlu0 %689
    %v691 = vsel %vm49, %v667, 0.0
    %692 = vadd.xlane.f32.xlu0 %v691
    %v693 = vpop.xlane.xlu0 %692
    %v694 = vsel %vm49, %v668, 0.0
    %695 = vadd.xlane.f32.xlu0 %v694
    %v696 = vpop.xlane.xlu0 %695
    %v697 = vsel %vm49, %v669, 0.0
    %698 = vadd.xlane.f32.xlu0 %v697
    %v699 = vpop.xlane.xlu0 %698
    %v700 = vsel %vm49, %v670, 0.0
    %701 = vadd.xlane.f32.xlu0 %v700
    %v702 = vpop.xlane.xlu0 %701
    %v703 = vsel %vm49, %v671, 0.0
    %704 = vadd.xlane.f32.xlu0 %v703
    %v705 = vpop.xlane.xlu0 %704
    %v706 = vsel %vm49, %v672, 0.0
    %707 = vadd.xlane.f32.xlu0 %v706
    %v708 = vpop.xlane.xlu0 %707
    %v709 = vmul.f32 %v659, %v659
    %v710 = vmul.f32 %v660, %v660
    %v711 = vrot.slane %v709, 4
    %v712 = vadd.f32 %v709, %v711
    %v713 = vrot.slane %v712, 2
    %v714 = vadd.f32 %v712, %v713
    %v715 = vrot.slane %v714, 1
    %v716 = vadd.f32 %v714, %v715
    %v717 = vrot.slane %v710, 4
    %v718 = vadd.f32 %v710, %v717
    %v719 = vrot.slane %v718, 2
    %v720 = vadd.f32 %v718, %v719
    %v721 = vrot.slane %v720, 1
    %v722 = vadd.f32 %v720, %v721
    %v723 = vmul.f32 %v646, -2.0
    %v724 = vmul.f32 %v647, -2.0
    %v725 = vmul.f32 %v648, -2.0
    %v726 = vmul.f32 %v649, -2.0
    %v727 = vmul.f32 %v650, -2.0
    %v728 = vmul.f32 %v651, -2.0
    %v729 = vmul.f32 %v652, -2.0
    %v730 = vmul.f32 %v653, -2.0
    %v731 = vmul.f32 %v654, -2.0
    %v732 = vmul.f32 %v655, -2.0
    %v733 = vmul.f32 %v656, -2.0
    %v734 = vmul.f32 %v657, -2.0
    %v736 = vsel %vm49, %v723, 0
    %v739 = vsel %vm49, %v724, 0
    %v742 = vsel %vm49, %v725, 0
    %v745 = vsel %vm49, %v726, 0
    %v748 = vsel %vm49, %v727, 0
    %v751 = vsel %vm49, %v728, 0
    %v754 = vsel %vm49, %v729, 0
    %v757 = vsel %vm49, %v730, 0
    %v760 = vsel %vm49, %v731, 0
    %v763 = vsel %vm49, %v732, 0
    %v766 = vsel %vm49, %v733, 0
    %v769 = vsel %vm49, %v734, 0
    %771 = vmatprep.subr.mxu0 %v660
    %772 = vmatpush1.msra.mxu0 %v659
    %773 = vmatprep.subr.mxu0 0.0
    %774 = vmatpush1.msra.mxu0 0.0
    %775 = vmatprep.subr.mxu0 0.0
    %776 = vmatpush1.msra.mxu0 0.0
    %777 = vmatprep.subr.mxu0 0.0
    %778 = vmatpush1.msra.mxu0 0.0
    %779 = vmatprep.subr.mxu0 0.0
    %780 = vmatpush1.msra.mxu0 0.0
    %781 = vmatprep.subr.mxu0 0.0
    %782 = vmatpush1.msra.mxu0 0.0
    %783 = vmatprep.subr.mxu0 0.0
    %784 = vmatpush1.msra.mxu0 0.0
    %785 = vmatprep.subr.mxu0 0.0
    %786 = vmatpush1.msra.mxu0 0.0
    %787 = vmatprep.subr.mxu0 0.0
    %788 = vmatpush1.msra.mxu0 0.0
    %789 = vmatprep.subr.mxu0 0.0
    %790 = vmatpush1.msra.mxu0 0.0
    %791 = vmatprep.subr.mxu0 0.0
    %792 = vmatpush1.msra.mxu0 0.0
    %793 = vmatprep.subr.mxu0 0.0
    %794 = vmatpush1.msra.mxu0 0.0
    %795 = vmatprep.subr.mxu0 0.0
    %796 = vmatpush1.msra.mxu0 0.0
    %797 = vmatprep.subr.mxu0 0.0
    %798 = vmatpush1.msra.mxu0 0.0
    %799 = vmatprep.subr.mxu0 0.0
    %800 = vmatpush1.msra.mxu0 0.0
    %801 = vmatprep.subr.mxu0 0.0
    %802 = vmatpush1.msra.mxu0 0.0
    %803 = vmatprep.subr.mxu0 0.0
    %804 = vmatpush1.msra.mxu0 0.0
    %805 = vmatprep.subr.mxu0 0.0
    %806 = vmatpush1.msra.mxu0 0.0
    %807 = vmatprep.subr.mxu0 0.0
    %808 = vmatpush1.msra.mxu0 0.0
    %809 = vmatprep.subr.mxu0 0.0
    %810 = vmatpush1.msra.mxu0 0.0
    %811 = vmatprep.subr.mxu0 0.0
    %812 = vmatpush1.msra.mxu0 0.0
    %813 = vmatprep.subr.mxu0 0.0
    %814 = vmatpush1.msra.mxu0 0.0
    %815 = vmatprep.subr.mxu0 0.0
    %816 = vmatpush1.msra.mxu0 0.0
    %817 = vmatprep.subr.mxu0 0.0
    %818 = vmatpush1.msra.mxu0 0.0
    %819 = vmatprep.subr.mxu0 0.0
    %820 = vmatpush1.msra.mxu0 0.0
    %821 = vmatprep.subr.mxu0 0.0
    %822 = vmatpush1.msra.mxu0 0.0
    %823 = vmatprep.subr.mxu0 0.0
    %824 = vmatpush1.msra.mxu0 0.0
    %825 = vmatprep.subr.mxu0 0.0
    %826 = vmatpush1.msra.mxu0 0.0
    %827 = vmatprep.subr.mxu0 0.0
    %828 = vmatpush1.msra.mxu0 0.0
    %829 = vmatprep.subr.mxu0 0.0
    %830 = vmatpush1.msra.mxu0 0.0
    %831 = vmatprep.subr.mxu0 0.0
    %832 = vmatpush1.msra.mxu0 0.0
    %833 = vmatprep.subr.mxu0 0.0
    %834 = vmatpush1.msra.mxu0 0.0
    %835 = vmatprep.mubr.f32.mxu0 0.0
    %836 = vmatmul.mubr.f32.gmra.mrb[0].mxu0 %v736
    %v837 = vpop.f32.mrb[0].mxu0
    %v838 = vadd.f32 0.0, %v837
    %v839 = vpop.f32.mrb[0].mxu0
    %v840 = vadd.f32 0.0, %v839
    %841 = vmatprep.mubr.f32.mxu0 0.0
    %842 = vmatmul.mubr.f32.gmra.mrb[0].mxu0 %v739
    %v843 = vpop.f32.mrb[0].mxu0
    %v844 = vadd.f32 0.0, %v843
    %v845 = vpop.f32.mrb[0].mxu0
    %v846 = vadd.f32 0.0, %v845
    %847 = vmatprep.mubr.f32.mxu0 0.0
    %848 = vmatmul.mubr.f32.gmra.mrb[0].mxu0 %v742
    %v849 = vpop.f32.mrb[0].mxu0
    %v850 = vadd.f32 0.0, %v849
    %v851 = vpop.f32.mrb[0].mxu0
    %v852 = vadd.f32 0.0, %v851
    %853 = vmatprep.mubr.f32.mxu0 0.0
    %854 = vmatmul.mubr.f32.gmra.mrb[0].mxu0 %v745
    %v855 = vpop.f32.mrb[0].mxu0
    %v856 = vadd.f32 0.0, %v855
    %v857 = vpop.f32.mrb[0].mxu0
    %v858 = vadd.f32 0.0, %v857
    %859 = vmatprep.mubr.f32.mxu0 0.0
    %860 = vmatmul.mubr.f32.gmra.mrb[0].mxu0 %v748
    %v861 = vpop.f32.mrb[0].mxu0
    %v862 = vadd.f32 0.0, %v861
    %v863 = vpop.f32.mrb[0].mxu0
    %v864 = vadd.f32 0.0, %v863
    %865 = vmatprep.mubr.f32.mxu0 0.0
    %866 = vmatmul.mubr.f32.gmra.mrb[0].mxu0 %v751
    %v867 = vpop.f32.mrb[0].mxu0
    %v868 = vadd.f32 0.0, %v867
    %v869 = vpop.f32.mrb[0].mxu0
    %v870 = vadd.f32 0.0, %v869
    %871 = vmatprep.mubr.f32.mxu0 0.0
    %872 = vmatmul.mubr.f32.gmra.mrb[0].mxu0 %v754
    %v873 = vpop.f32.mrb[0].mxu0
    %v874 = vadd.f32 0.0, %v873
    %v875 = vpop.f32.mrb[0].mxu0
    %v876 = vadd.f32 0.0, %v875
    %877 = vmatprep.mubr.f32.mxu0 0.0
    %878 = vmatmul.mubr.f32.gmra.mrb[0].mxu0 %v757
    %v879 = vpop.f32.mrb[0].mxu0
    %v880 = vadd.f32 0.0, %v879
    %v881 = vpop.f32.mrb[0].mxu0
    %v882 = vadd.f32 0.0, %v881
    %883 = vmatprep.mubr.f32.mxu0 0.0
    %884 = vmatmul.mubr.f32.gmra.mrb[0].mxu0 %v760
    %v885 = vpop.f32.mrb[0].mxu0
    %v886 = vadd.f32 0.0, %v885
    %v887 = vpop.f32.mrb[0].mxu0
    %v888 = vadd.f32 0.0, %v887
    %889 = vmatprep.mubr.f32.mxu0 0.0
    %890 = vmatmul.mubr.f32.gmra.mrb[0].mxu0 %v763
    %v891 = vpop.f32.mrb[0].mxu0
    %v892 = vadd.f32 0.0, %v891
    %v893 = vpop.f32.mrb[0].mxu0
    %v894 = vadd.f32 0.0, %v893
    %895 = vmatprep.mubr.f32.mxu0 0.0
    %896 = vmatmul.mubr.f32.gmra.mrb[0].mxu0 %v766
    %v897 = vpop.f32.mrb[0].mxu0
    %v898 = vadd.f32 0.0, %v897
    %v899 = vpop.f32.mrb[0].mxu0
    %v900 = vadd.f32 0.0, %v899
    %901 = vmatprep.mubr.f32.mxu0 0.0
    %902 = vmatmul.mubr.f32.gmra.mrb[0].mxu0 %v769
    %v903 = vpop.f32.mrb[0].mxu0
    %v904 = vadd.f32 0.0, %v903
    %v905 = vpop.f32.mrb[0].mxu0
    %v906 = vadd.f32 0.0, %v905
    %907 = vdwg.mxu0
    %v908 = vadd.f32 %v675, %v716
    %v909 = vadd.f32 %v675, %v722
    %v910 = vadd.f32 %v678, %v716
    %v911 = vadd.f32 %v678, %v722
    %v912 = vadd.f32 %v681, %v716
    %v913 = vadd.f32 %v681, %v722
    %v914 = vadd.f32 %v684, %v716
    %v915 = vadd.f32 %v684, %v722
    %v916 = vadd.f32 %v687, %v716
    %v917 = vadd.f32 %v687, %v722
    %v918 = vadd.f32 %v690, %v716
    %v919 = vadd.f32 %v690, %v722
    %v920 = vadd.f32 %v693, %v716
    %v921 = vadd.f32 %v693, %v722
    %v922 = vadd.f32 %v696, %v716
    %v923 = vadd.f32 %v696, %v722
    %v924 = vadd.f32 %v699, %v716
    %v925 = vadd.f32 %v699, %v722
    %v926 = vadd.f32 %v702, %v716
    %v927 = vadd.f32 %v702, %v722
    %v928 = vadd.f32 %v705, %v716
    %v929 = vadd.f32 %v705, %v722
    %v930 = vadd.f32 %v708, %v716
    %v931 = vadd.f32 %v708, %v722
    %v932 = vadd.f32 %v908, %v838
    %v933 = vadd.f32 %v909, %v840
    %v934 = vadd.f32 %v910, %v844
    %v935 = vadd.f32 %v911, %v846
    %v936 = vadd.f32 %v912, %v850
    %v937 = vadd.f32 %v913, %v852
    %v938 = vadd.f32 %v914, %v856
    %v939 = vadd.f32 %v915, %v858
    %v940 = vadd.f32 %v916, %v862
    %v941 = vadd.f32 %v917, %v864
    %v942 = vadd.f32 %v918, %v868
    %v943 = vadd.f32 %v919, %v870
    %v944 = vadd.f32 %v920, %v874
    %v945 = vadd.f32 %v921, %v876
    %v946 = vadd.f32 %v922, %v880
    %v947 = vadd.f32 %v923, %v882
    %v948 = vadd.f32 %v924, %v886
    %v949 = vadd.f32 %v925, %v888
    %v950 = vadd.f32 %v926, %v892
    %v951 = vadd.f32 %v927, %v894
    %v952 = vadd.f32 %v928, %v898
    %v953 = vadd.f32 %v929, %v900
    %v954 = vadd.f32 %v930, %v904
    %v955 = vadd.f32 %v931, %v906
    %v956 = vmin.f32 %v932, %v933
    %957 = vmin.xlane.f32.xlu0 %v956
    %v958 = vpop.xlane.xlu0 %957
    %v959 = vmin.f32 %v934, %v935
    %960 = vmin.xlane.f32.xlu0 %v959
    %v961 = vpop.xlane.xlu0 %960
    %v962 = vmin.f32 %v936, %v937
    %963 = vmin.xlane.f32.xlu0 %v962
    %v964 = vpop.xlane.xlu0 %963
    %v965 = vmin.f32 %v938, %v939
    %966 = vmin.xlane.f32.xlu0 %v965
    %v967 = vpop.xlane.xlu0 %966
    %v968 = vmin.f32 %v940, %v941
    %969 = vmin.xlane.f32.xlu0 %v968
    %v970 = vpop.xlane.xlu0 %969
    %v971 = vmin.f32 %v942, %v943
    %972 = vmin.xlane.f32.xlu0 %v971
    %v973 = vpop.xlane.xlu0 %972
    %v974 = vmin.f32 %v944, %v945
    %975 = vmin.xlane.f32.xlu0 %v974
    %v976 = vpop.xlane.xlu0 %975
    %v977 = vmin.f32 %v946, %v947
    %978 = vmin.xlane.f32.xlu0 %v977
    %v979 = vpop.xlane.xlu0 %978
    %v980 = vmin.f32 %v948, %v949
    %981 = vmin.xlane.f32.xlu0 %v980
    %v982 = vpop.xlane.xlu0 %981
    %v983 = vmin.f32 %v950, %v951
    %984 = vmin.xlane.f32.xlu0 %v983
    %v985 = vpop.xlane.xlu0 %984
    %v986 = vmin.f32 %v952, %v953
    %987 = vmin.xlane.f32.xlu0 %v986
    %v988 = vpop.xlane.xlu0 %987
    %v989 = vmin.f32 %v954, %v955
    %990 = vmin.xlane.f32.xlu0 %v989
    %v991 = vpop.xlane.xlu0 %990
    %v992 = vmin.f32 %v932, %v936
    %v993 = vmin.f32 %v934, %v938
    %v994 = vmin.f32 %v992, %v940
    %v995 = vmin.f32 %v993, %v942
    %v996 = vmin.f32 %v994, %v944
    %v997 = vmin.f32 %v995, %v946
    %v998 = vmin.f32 %v996, %v948
    %v999 = vmin.f32 %v997, %v950
    %v1000 = vmin.f32 %v998, %v952
    %v1001 = vmin.f32 %v999, %v954
    %v1002 = vmin.f32 %v1000, %v1001
    %v1003 = vrot.slane %v1002, 4
    %v1004 = vmin.f32 %v1002, %v1003
    %v1005 = vrot.slane %v1004, 2
    %v1006 = vmin.f32 %v1004, %v1005
    %v1007 = vrot.slane %v1006, 1
    %v1008 = vmin.f32 %v1006, %v1007
    %v1009 = vmin.f32 %v933, %v937
    %v1010 = vmin.f32 %v935, %v939
    %v1011 = vmin.f32 %v1009, %v941
    %v1012 = vmin.f32 %v1010, %v943
    %v1013 = vmin.f32 %v1011, %v945
    %v1014 = vmin.f32 %v1012, %v947
    %v1015 = vmin.f32 %v1013, %v949
    %v1016 = vmin.f32 %v1014, %v951
    %v1017 = vmin.f32 %v1015, %v953
    %v1018 = vmin.f32 %v1016, %v955
    %v1019 = vmin.f32 %v1017, %v1018
    %v1020 = vrot.slane %v1019, 4
    %v1021 = vmin.f32 %v1019, %v1020
    %v1022 = vrot.slane %v1021, 2
    %v1023 = vmin.f32 %v1021, %v1022
    %v1024 = vrot.slane %v1023, 1
    %v1025 = vmin.f32 %v1023, %v1024
    %v1026 = vmax.f32 %v958, 0.0
    %v1027 = vmax.f32 %v961, 0.0
    %v1028 = vmax.f32 %v964, 0.0
    %v1029 = vmax.f32 %v967, 0.0
    %v1030 = vmax.f32 %v970, 0.0
    %v1031 = vmax.f32 %v973, 0.0
    %v1032 = vmax.f32 %v976, 0.0
    %v1033 = vmax.f32 %v979, 0.0
    %v1034 = vmax.f32 %v982, 0.0
    %v1035 = vmax.f32 %v985, 0.0
    %v1036 = vmax.f32 %v988, 0.0
    %v1037 = vmax.f32 %v991, 0.0
    %v1038 = vrsqrt.pop %v1026
    %v1039 = vmul.f32 %v1026, %v1038
    %vm1040 = vcmp.eq.f32.partialorder %v1026, inf
    %v1041 = vsel %vm1040, %v1026, %v1039
    %vm1042 = vcmp.eq.f32.partialorder %v1026, 0.0
    %v1043 = vand.u32 %v1026, 2147483648
    %v1044 = vsel %vm1042, %v1043, %v1041
    %v1045 = vrsqrt.pop %v1027
    %v1046 = vmul.f32 %v1027, %v1045
    %vm1047 = vcmp.eq.f32.partialorder %v1027, inf
    %v1048 = vsel %vm1047, %v1027, %v1046
    %vm1049 = vcmp.eq.f32.partialorder %v1027, 0.0
    %v1050 = vand.u32 %v1027, 2147483648
    %v1051 = vsel %vm1049, %v1050, %v1048
    %v1052 = vrsqrt.pop %v1028
    %v1053 = vmul.f32 %v1028, %v1052
    %vm1054 = vcmp.eq.f32.partialorder %v1028, inf
    %v1055 = vsel %vm1054, %v1028, %v1053
    %vm1056 = vcmp.eq.f32.partialorder %v1028, 0.0
    %v1057 = vand.u32 %v1028, 2147483648
    %v1058 = vsel %vm1056, %v1057, %v1055
    %v1059 = vrsqrt.pop %v1029
    %v1060 = vmul.f32 %v1029, %v1059
    %vm1061 = vcmp.eq.f32.partialorder %v1029, inf
    %v1062 = vsel %vm1061, %v1029, %v1060
    %vm1063 = vcmp.eq.f32.partialorder %v1029, 0.0
    %v1064 = vand.u32 %v1029, 2147483648
    %v1065 = vsel %vm1063, %v1064, %v1062
    %v1066 = vrsqrt.pop %v1030
    %v1067 = vmul.f32 %v1030, %v1066
    %vm1068 = vcmp.eq.f32.partialorder %v1030, inf
    %v1069 = vsel %vm1068, %v1030, %v1067
    %vm1070 = vcmp.eq.f32.partialorder %v1030, 0.0
    %v1071 = vand.u32 %v1030, 2147483648
    %v1072 = vsel %vm1070, %v1071, %v1069
    %v1073 = vrsqrt.pop %v1031
    %v1074 = vmul.f32 %v1031, %v1073
    %vm1075 = vcmp.eq.f32.partialorder %v1031, inf
    %v1076 = vsel %vm1075, %v1031, %v1074
    %vm1077 = vcmp.eq.f32.partialorder %v1031, 0.0
    %v1078 = vand.u32 %v1031, 2147483648
    %v1079 = vsel %vm1077, %v1078, %v1076
    %v1080 = vrsqrt.pop %v1032
    %v1081 = vmul.f32 %v1032, %v1080
    %vm1082 = vcmp.eq.f32.partialorder %v1032, inf
    %v1083 = vsel %vm1082, %v1032, %v1081
    %vm1084 = vcmp.eq.f32.partialorder %v1032, 0.0
    %v1085 = vand.u32 %v1032, 2147483648
    %v1086 = vsel %vm1084, %v1085, %v1083
    %v1087 = vrsqrt.pop %v1033
    %v1088 = vmul.f32 %v1033, %v1087
    %vm1089 = vcmp.eq.f32.partialorder %v1033, inf
    %v1090 = vsel %vm1089, %v1033, %v1088
    %vm1091 = vcmp.eq.f32.partialorder %v1033, 0.0
    %v1092 = vand.u32 %v1033, 2147483648
    %v1093 = vsel %vm1091, %v1092, %v1090
    %v1094 = vrsqrt.pop %v1034
    %v1095 = vmul.f32 %v1034, %v1094
    %vm1096 = vcmp.eq.f32.partialorder %v1034, inf
    %v1097 = vsel %vm1096, %v1034, %v1095
    %vm1098 = vcmp.eq.f32.partialorder %v1034, 0.0
    %v1099 = vand.u32 %v1034, 2147483648
    %v1100 = vsel %vm1098, %v1099, %v1097
    %v1101 = vrsqrt.pop %v1035
    %v1102 = vmul.f32 %v1035, %v1101
    %vm1103 = vcmp.eq.f32.partialorder %v1035, inf
    %v1104 = vsel %vm1103, %v1035, %v1102
    %vm1105 = vcmp.eq.f32.partialorder %v1035, 0.0
    %v1106 = vand.u32 %v1035, 2147483648
    %v1107 = vsel %vm1105, %v1106, %v1104
    %v1108 = vrsqrt.pop %v1036
    %v1109 = vmul.f32 %v1036, %v1108
    %vm1110 = vcmp.eq.f32.partialorder %v1036, inf
    %v1111 = vsel %vm1110, %v1036, %v1109
    %vm1112 = vcmp.eq.f32.partialorder %v1036, 0.0
    %v1113 = vand.u32 %v1036, 2147483648
    %v1114 = vsel %vm1112, %v1113, %v1111
    %v1115 = vrsqrt.pop %v1037
    %v1116 = vmul.f32 %v1037, %v1115
    %vm1117 = vcmp.eq.f32.partialorder %v1037, inf
    %v1118 = vsel %vm1117, %v1037, %v1116
    %vm1119 = vcmp.eq.f32.partialorder %v1037, 0.0
    %v1120 = vand.u32 %v1037, 2147483648
    %v1121 = vsel %vm1119, %v1120, %v1118
    %v1122 = vmax.f32 %v1008, 0.0
    %v1123 = vmax.f32 %v1025, 0.0
    %v1124 = vrsqrt.pop %v1122
    %v1125 = vmul.f32 %v1122, %v1124
    %vm1126 = vcmp.eq.f32.partialorder %v1122, inf
    %v1127 = vsel %vm1126, %v1122, %v1125
    %vm1128 = vcmp.eq.f32.partialorder %v1122, 0.0
    %v1129 = vand.u32 %v1122, 2147483648
    %v1130 = vsel %vm1128, %v1129, %v1127
    %v1131 = vrsqrt.pop %v1123
    %v1132 = vmul.f32 %v1123, %v1131
    %vm1133 = vcmp.eq.f32.partialorder %v1123, inf
    %v1134 = vsel %vm1133, %v1123, %v1132
    %vm1135 = vcmp.eq.f32.partialorder %v1123, 0.0
    %v1136 = vand.u32 %v1123, 2147483648
    %v1137 = vsel %vm1135, %v1136, %v1134
    %v1138 = vstv %s642
    %vm1139 = vcmp.lt.s32.totalorder %v516, %v1138
    %vm1140 = vcmp.lt.s32.totalorder %v517, %v1138
    %vm1141 = vcmp.lt.s32.totalorder %v518, %v1138
    %vm1142 = vcmp.lt.s32.totalorder %v519, %v1138
    %vm1143 = vcmp.lt.s32.totalorder %v520, %v1138
    %vm1144 = vcmp.lt.s32.totalorder %v521, %v1138
    %vm1145 = vcmp.lt.s32.totalorder %v522, %v1138
    %vm1146 = vcmp.lt.s32.totalorder %v523, %v1138
    %vm1147 = vcmp.lt.s32.totalorder %v524, %v1138
    %vm1148 = vcmp.lt.s32.totalorder %v525, %v1138
    %vm1149 = vcmp.lt.s32.totalorder %v526, %v1138
    %vm1150 = vcmp.lt.s32.totalorder %v527, %v1138
    %v1151 = vstv %s644
    %vm1152 = vcmp.lt.s32.totalorder %v542, %v1151
    %vm1153 = vcmp.lt.s32.totalorder %v543, %v1151
    %v1154 = vsel %vm1139, %v1044, 0.0
    %v1155 = vsel %vm1140, %v1051, 0.0
    %v1156 = vsel %vm1141, %v1058, 0.0
    %v1157 = vsel %vm1142, %v1065, 0.0
    %v1158 = vsel %vm1143, %v1072, 0.0
    %v1159 = vsel %vm1144, %v1079, 0.0
    %v1160 = vsel %vm1145, %v1086, 0.0
    %v1161 = vsel %vm1146, %v1093, 0.0
    %v1162 = vsel %vm1147, %v1100, 0.0
    %v1163 = vsel %vm1148, %v1107, 0.0
    %v1164 = vsel %vm1149, %v1114, 0.0
    %v1165 = vsel %vm1150, %v1121, 0.0
    %v1166 = vsel %vm1152, %v1130, 0.0
    %v1167 = vsel %vm1153, %v1137, 0.0
    %s1168 = scvt.s32.f32 %s642
    %v1169 = vstv %s1168
    %v1170 = vrcp.pop %v1169
    %s1171 = vtos %v1170
    %s1172 = scvt.s32.f32 %s644
    %v1173 = vstv %s1172
    %v1174 = vrcp.pop %v1173
    %s1175 = vtos %v1174
    %v1176 = vsel %vm569, %v1154, 0.0
    %v1177 = vsel %vm569, %v1155, 0.0
    %v1178 = vadd.f32 %v1176, %v1177
    %v1179 = vsel %vm569, %v1156, 0.0
    %v1180 = vadd.f32 %v1178, %v1179
    %v1181 = vsel %vm569, %v1157, 0.0
    %v1182 = vadd.f32 %v1180, %v1181
    %v1183 = vsel %vm569, %v1158, 0.0
    %v1184 = vadd.f32 %v1182, %v1183
    %v1185 = vsel %vm569, %v1159, 0.0
    %v1186 = vadd.f32 %v1184, %v1185
    %v1187 = vsel %vm569, %v1160, 0.0
    %v1188 = vadd.f32 %v1186, %v1187
    %v1189 = vsel %vm569, %v1161, 0.0
    %v1190 = vadd.f32 %v1188, %v1189
    %v1191 = vsel %vm569, %v1162, 0.0
    %v1192 = vadd.f32 %v1190, %v1191
    %v1193 = vsel %vm569, %v1163, 0.0
    %v1194 = vadd.f32 %v1192, %v1193
    %v1195 = vsel %vm569, %v1164, 0.0
    %v1196 = vadd.f32 %v1194, %v1195
    %v1197 = vsel %vm569, %v1165, 0.0
    %v1198 = vadd.f32 %v1196, %v1197
    %1199 = vadd.xlane.f32.xlu0 %v1198
    %v1200 = vpop.xlane.xlu0 %1199
    %v1201 = vrot.slane %v1200, 4
    %v1202 = vadd.f32 %v1200, %v1201
    %v1203 = vrot.slane %v1202, 2
    %v1204 = vadd.f32 %v1202, %v1203
    %v1205 = vrot.slane %v1204, 1
    %v1206 = vadd.f32 %v1204, %v1205
    %s1207 = vtos %v1206
    %s1208 = smul.f32 %s1207, %s1171
    %v1209 = vmax.f32 %v1154, %v1158
    %v1210 = vmax.f32 %v1155, %v1159
    %v1211 = vmax.f32 %v1156, %v1160
    %v1212 = vmax.f32 %v1157, %v1161
    %v1213 = vmax.f32 %v1209, %v1162
    %v1214 = vmax.f32 %v1210, %v1163
    %v1215 = vmax.f32 %v1211, %v1164
    %v1216 = vmax.f32 %v1212, %v1165
    %v1217 = vmax.f32 %v1213, %v1214
    %v1218 = vmax.f32 %v1215, %v1216
    %v1219 = vmax.f32 %v1217, %v1218
    %v1220 = vrot.slane %v1219, 4
    %v1221 = vmax.f32 %v1219, %v1220
    %v1222 = vrot.slane %v1221, 2
    %v1223 = vmax.f32 %v1221, %v1222
    %v1224 = vrot.slane %v1223, 1
    %v1225 = vmax.f32 %v1223, %v1224
    %s1226 = vtos %v1225
    %v1227 = vsel %vm621, %v1166, 0.0
    %v1228 = vsel %vm621, %v1167, 0.0
    %v1229 = vadd.f32 %v1227, %v1228
    %1230 = vadd.xlane.f32.xlu0 %v1229
    %v1231 = vpop.xlane.xlu0 %1230
    %v1232 = vrot.slane %v1231, 4
    %v1233 = vadd.f32 %v1231, %v1232
    %v1234 = vrot.slane %v1233, 2
    %v1235 = vadd.f32 %v1233, %v1234
    %v1236 = vrot.slane %v1235, 1
    %v1237 = vadd.f32 %v1235, %v1236
    %s1238 = vtos %v1237
    %s1239 = smul.f32 %s1238, %s1175
    %s1240 = smul.f32 %s1239, 5.0
    %s1241 = sadd.f32 %s1240, %s1208
    %s1242 = sadd.f32 %s1241, %s1226
    %v1243 = vstv %s1242
    %v1244 = vsel %vm621, %v638, %v1243
    %1245 = vst [vmem:[#allocation4] sm:$0x3] %v1244
    // Predicated region
    $region10: #{tpu_custom_call.1} parent=1 // pred_check
      _
    $region11: #{tpu_custom_call.1} parent=1 // pred_check_branch
      %1247 = sbr.rel (0) target = $region13
    $region12: #{tpu_custom_call.1} parent=1 // pred_region
      %s1249 = ssub.s32 32, 32
      %1250 = vsyncadd [#allocation5], %s1249
      %s1252 = sshll.u32 [#allocation4], 4
      %s1253 = int_to_ptr.vmem [resolvable:$true] %s1252
      %1255 = dma.vmem_to_hbm [thread:$0]  %s1253, 32, %s3, [#allocation5]
    $region13: #{tpu_custom_call.1} parent=1 // pred_fallthru
      _
    // Predicated region
    $region14: #{tpu_custom_call.1} parent=1 // pred_check
      _
    $region15: #{tpu_custom_call.1} parent=1 // pred_check_branch
      %1257 = sbr.rel (0) target = $region17
    $region16: #{tpu_custom_call.1} parent=1 // pred_region
      %1258 = dma.done [#allocation5], 32
    $region17: #{tpu_custom_call.1} parent=1 // pred_fallthru
      _
    %1259 = vsyncpa [#allocation5], 1

</llo_original>
